<compile_context>
chip_gen: v5e
topology: v5e:2x2
jax: 0.10.0
libtpu: 0.0.40
codegen_flags: <defaults>
</compile_context>

<pallas_src>
from functools import partial

import jax
import jax.numpy as jnp
import numpy as np
from jax.experimental import pallas as pl
from jax.experimental.pallas import tpu as pltpu


def _attention_kernel(q_ref, k_ref, wq_ref, wkv_ref, wp_ref, bp_ref, out_ref,
                      *, num_heads, nq, nk):
    # q_ref:   (Bb*Nq, C) f32 query rows for this batch block
    # k_ref:   (Bb*Nk, C) f32 key rows for this batch block
    # wq_ref:  (C, C)    bf16, pre-transposed Q weight with softmax scale folded in
    # wkv_ref: (C, 2C)   bf16, pre-transposed fused [Wk | Wv]
    # wp_ref:  (H, D, C) bf16, pre-transposed output-projection weight, split per head
    # bp_ref:  (1, C)    f32 output-projection bias
    # out_ref: (Bb*Nq, C)
    rows_q, C = q_ref.shape
    bb = rows_q // nq
    D = C // num_heads

    # --- fused input projections: one wide MXU matmul each, bf16 operands, f32 acc ---
    qp = jnp.dot(q_ref[...].astype(jnp.bfloat16), wq_ref[...],
                 preferred_element_type=jnp.float32)                 # (Bb*Nq, C)
    kvp = jnp.dot(k_ref[...].astype(jnp.bfloat16), wkv_ref[...],
                  preferred_element_type=jnp.float32)                 # (Bb*Nk, 2C)

    q3 = qp.reshape(bb, nq, C)
    k3 = kvp[:, :C].reshape(bb, nk, C)
    v3 = kvp[:, C:].reshape(bb, nk, C)

    # --- per-head attention; output projection folded into the head loop so the
    #     (Bb*Nq, C) result is accumulated lane-dense (no masked D-wide stores/concat) ---
    y = jnp.zeros((rows_q, C), jnp.float32)
    for h in range(num_heads):
        lo, hi = h * D, (h + 1) * D
        qh = q3[:, :, lo:hi]                                          # (Bb, Nq, D) f32
        kh = k3[:, :, lo:hi]                                          # (Bb, Nk, D) f32
        vh = v3[:, :, lo:hi]                                          # (Bb, Nk, D) f32

        # scores (softmax scale already folded into Wq)
        s = jnp.einsum('bqd,bkd->bqk',
                       qh.astype(jnp.bfloat16), kh.astype(jnp.bfloat16),
                       preferred_element_type=jnp.float32)            # (Bb, Nq, Nk) f32
        m = jnp.max(s, axis=-1, keepdims=True)
        p = jnp.exp(s - m)                                            # f32 (EUP)
        l = jnp.sum(p, axis=-1, keepdims=True)                        # (Bb, Nq, 1) f32
        # attn_drop p=0.0 -> identity
        oh = jnp.einsum('bqk,bkd->bqd',
                        p.astype(jnp.bfloat16), vh.astype(jnp.bfloat16),
                        preferred_element_type=jnp.float32)           # (Bb, Nq, D) f32
        # deferred softmax normalization on the D-wide output (EUP reciprocal)
        oh = oh * pl.reciprocal(l, approx=True)

        # per-head slice of the output projection: (Bb*Nq, D) @ (D, C)
        wp_h = wp_ref[h]                                              # (D, C) bf16
        y = y + jnp.dot(oh.reshape(rows_q, D).astype(jnp.bfloat16), wp_h,
                        preferred_element_type=jnp.float32)

    # bias add in f32; proj_drop p=0.0 -> identity
    out_ref[...] = (y + bp_ref[...]).astype(out_ref.dtype)


def attention_pallas(query, key, wq, wk, wv, wp, bp, num_heads, block_b=None):
    B, Nq, C = query.shape
    _, Nk, _ = key.shape
    D = C // num_heads
    scale = D ** (-0.5)

    # Host-side weight prep (done once, outside the kernel):
    #   - transpose to (in, out) so the kernel does x @ W directly (no in-kernel .T)
    #   - fold the softmax scale into Wq BEFORE the bf16 downcast
    #   - fuse Wk / Wv (same input) into one (C, 2C) matrix -> one wide matmul
    #   - split Wp^T into per-head (H, D, C) blocks for lane-dense per-head accumulation
    wq_t = (wq * scale).T.astype(jnp.bfloat16)                         # (C, C)
    wkv_t = jnp.concatenate([wk.T, wv.T], axis=1).astype(jnp.bfloat16)  # (C, 2C)
    wp_t = wp.T.reshape(num_heads, D, C).astype(jnp.bfloat16)          # (H, D, C)
    bp2d = bp.reshape(1, C).astype(jnp.float32)

    if block_b is None:
        # Target ~256 MXU rows per grid step (v6e/v7x 2x256 MXU; fine on v5e too),
        # but keep grid >= 2 so v7x's two TensorCores both get work.
        block_b = max(1, min(B, -(-256 // Nq)))
        if B >= 2:
            block_b = min(block_b, max(1, B // 2))

    # Pad B up to a multiple of block_b (padded rows are computed and discarded) instead
    # of shrinking block_b toward 1 for awkward batch sizes.
    grid_b = pl.cdiv(B, block_b)
    B_pad = grid_b * block_b
    if B_pad != B:
        pad = B_pad - B
        query = jnp.concatenate(
            [query, jnp.zeros((pad, Nq, C), query.dtype)], axis=0)
        key = jnp.concatenate(
            [key, jnp.zeros((pad, Nk, C), key.dtype)], axis=0)

    # Lane/sublane-dense 2D slabs for the pipelined inputs/outputs.
    q2d = query.reshape(B_pad * Nq, C)
    k2d = key.reshape(B_pad * Nk, C)

    kernel = partial(_attention_kernel, num_heads=num_heads, nq=Nq, nk=Nk)

    flops = 2 * B_pad * (Nq * C * C + Nk * C * 2 * C
                         + 2 * num_heads * Nq * Nk * D + Nq * C * C)
    transcendentals = B_pad * num_heads * Nq * Nk
    bytes_accessed = (4 * (B_pad * Nq * C * 2 + B_pad * Nk * C)      # f32 q, out, k
                      + 2 * (C * C + C * 2 * C + C * C)              # bf16 weights
                      + 4 * C)                                       # f32 bias

    out2d = pl.pallas_call(
        kernel,
        out_shape=jax.ShapeDtypeStruct((B_pad * Nq, C), query.dtype),
        grid_spec=pltpu.PrefetchScalarGridSpec(
            num_scalar_prefetch=0,
            grid=(grid_b,),
            in_specs=[
                pl.BlockSpec((block_b * Nq, C), lambda b: (b, 0)),     # query rows
                pl.BlockSpec((block_b * Nk, C), lambda b: (b, 0)),     # key rows
                pl.BlockSpec((C, C), lambda b: (0, 0)),                # Wq^T * scale
                pl.BlockSpec((C, 2 * C), lambda b: (0, 0)),            # [Wk^T | Wv^T]
                pl.BlockSpec((num_heads, D, C), lambda b: (0, 0, 0)),  # Wp^T per head
                pl.BlockSpec((1, C), lambda b: (0, 0)),                # bproj
            ],
            out_specs=pl.BlockSpec((block_b * Nq, C), lambda b: (b, 0)),
        ),
        compiler_params=pltpu.CompilerParams(
            dimension_semantics=("parallel",)),
        cost_estimate=pl.CostEstimate(flops=flops,
                                      transcendentals=transcendentals,
                                      bytes_accessed=bytes_accessed),
    )(q2d, k2d, wq_t, wkv_t, wp_t, bp2d)

    return out2d.reshape(B_pad, Nq, C)[:B]


def attention_reference(query, key, wq, wk, wv, wp, bp, num_heads):
    """Pure-JAX f32 reference mirroring the PyTorch forward."""
    B, Nq, C = query.shape
    _, Nk, _ = key.shape
    D = C // num_heads
    scale = D ** (-0.5)

    q = (query @ wq.T).reshape(B, Nq, num_heads, D).transpose(0, 2, 1, 3)
    k = (key @ wk.T).reshape(B, Nk, num_heads, D).transpose(0, 2, 1, 3)
    v = (key @ wv.T).reshape(B, Nk, num_heads, D).transpose(0, 2, 1, 3)

    attn = jnp.einsum("bhqd,bhkd->bhqk", q, k) * scale
    attn = jax.nn.softmax(attn, axis=-1)
    x = jnp.einsum("bhqk,bhkd->bhqd", attn, v)
    x = x.transpose(0, 2, 1, 3).reshape(B, Nq, C)
    return x @ wp.T + bp


if __name__ == "__main__":
    B, Nq, Nk, C = 2, 8, 16, 32
    num_heads = 4

    key0 = jax.random.PRNGKey(0)
    k_q, k_k, k_wq, k_wk, k_wv, k_wp, k_bp = jax.random.split(key0, 7)

    query = jax.random.normal(k_q, (B, Nq, C), dtype=jnp.float32)
    keyx = jax.random.normal(k_k, (B, Nk, C), dtype=jnp.float32)

    # Deterministic parameter init (PyTorch Linear weight shape: (out, in))
    bound = 1.0 / np.sqrt(C)
    wq = jax.random.uniform(k_wq, (C, C), jnp.float32, -bound, bound)
    wk = jax.random.uniform(k_wk, (C, C), jnp.float32, -bound, bound)
    wv = jax.random.uniform(k_wv, (C, C), jnp.float32, -bound, bound)
    wp = jax.random.uniform(k_wp, (C, C), jnp.float32, -bound, bound)
    bp = jax.random.uniform(k_bp, (C,), jnp.float32, -bound, bound)

    out = attention_pallas(query, keyx, wq, wk, wv, wp, bp, num_heads)
    out = jax.block_until_ready(out)

    ref = attention_reference(query, keyx, wq, wk, wv, wp, bp, num_heads)
    # bf16 MXU operands -> loosened tolerance vs. the f32 reference
    np.testing.assert_allclose(np.asarray(out), np.asarray(ref), rtol=2e-2, atol=2e-2)

    print("KERNEL_OK")
</pallas_src>

<mosaic_0001>
module attributes {stable_mosaic.version = 11 : i64} {
  func.func @_attention_kernel(%arg0: i32, %arg1: memref<8x32xf32, #tpu.memory_space<vmem>>, %arg2: memref<16x32xf32, #tpu.memory_space<vmem>>, %arg3: memref<32x32xbf16, #tpu.memory_space<vmem>>, %arg4: memref<32x64xbf16, #tpu.memory_space<vmem>>, %arg5: memref<4x8x32xbf16, #tpu.memory_space<vmem>>, %arg6: memref<1x32xf32, #tpu.memory_space<vmem>>, %arg7: memref<8x32xf32, #tpu.memory_space<vmem>>) attributes {dimension_semantics = [#tpu.dimension_semantics<parallel>], iteration_bounds = array<i64: 2>, scalar_prefetch = 0 : i64, scratch_operands = 0 : i64, tpu.core_type = #tpu.core_type<tc>, window_params = [{transform_indices = @transform_0, window_bounds = array<i64: 8, 32>}, {transform_indices = @transform_1, window_bounds = array<i64: 16, 32>}, {pipeline_mode = #tpu.pipeline_mode<synchronous>, transform_indices = @transform_2, window_bounds = array<i64: 32, 32>}, {pipeline_mode = #tpu.pipeline_mode<synchronous>, transform_indices = @transform_3, window_bounds = array<i64: 32, 64>}, {pipeline_mode = #tpu.pipeline_mode<synchronous>, transform_indices = @transform_4, window_bounds = array<i64: 4, 8, 32>}, {pipeline_mode = #tpu.pipeline_mode<synchronous>, transform_indices = @transform_5, window_bounds = array<i64: 1, 32>}, {transform_indices = @transform_6, window_bounds = array<i64: 8, 32>}]} {
    %c0 = arith.constant 0 : index
    %c0_0 = arith.constant 0 : index
    %0 = vector.load %arg1[%c0, %c0_0] : memref<8x32xf32, #tpu.memory_space<vmem>>, vector<8x32xf32>
    %1 = arith.truncf %0 : vector<8x32xf32> to vector<8x32xbf16>
    %c0_1 = arith.constant 0 : index
    %c0_2 = arith.constant 0 : index
    %2 = vector.load %arg3[%c0_1, %c0_2] : memref<32x32xbf16, #tpu.memory_space<vmem>>, vector<32x32xbf16>
    %cst = arith.constant dense<0.000000e+00> : vector<8x32xf32>
    %3 = tpu.matmul %1, %2, %cst {dimension_numbers = #tpu.dot_dimension_numbers<[1], [0], [0], [1], [0, 0, 1, 1], [], []>} : vector<8x32xbf16>, vector<32x32xbf16>, vector<8x32xf32> -> vector<8x32xf32>
    %c0_3 = arith.constant 0 : index
    %c0_4 = arith.constant 0 : index
    %4 = vector.load %arg2[%c0_3, %c0_4] : memref<16x32xf32, #tpu.memory_space<vmem>>, vector<16x32xf32>
    %5 = arith.truncf %4 : vector<16x32xf32> to vector<16x32xbf16>
    %c0_5 = arith.constant 0 : index
    %c0_6 = arith.constant 0 : index
    %6 = vector.load %arg4[%c0_5, %c0_6] : memref<32x64xbf16, #tpu.memory_space<vmem>>, vector<32x64xbf16>
    %cst_7 = arith.constant dense<0.000000e+00> : vector<16x64xf32>
    %7 = tpu.matmul %5, %6, %cst_7 {dimension_numbers = #tpu.dot_dimension_numbers<[1], [0], [0], [1], [0, 0, 1, 1], [], []>} : vector<16x32xbf16>, vector<32x64xbf16>, vector<16x64xf32> -> vector<16x64xf32>
    %8 = vector.shape_cast %3 : vector<8x32xf32> to vector<1x8x32xf32>
    %9 = vector.extract_strided_slice %7 {offsets = [0, 0], sizes = [16, 32], strides = [1, 1]} : vector<16x64xf32> to vector<16x32xf32>
    %10 = vector.shape_cast %9 : vector<16x32xf32> to vector<1x16x32xf32>
    %11 = vector.extract_strided_slice %7 {offsets = [0, 32], sizes = [16, 32], strides = [1, 1]} : vector<16x64xf32> to vector<16x32xf32>
    %12 = vector.shape_cast %11 : vector<16x32xf32> to vector<1x16x32xf32>
    %cst_8 = arith.constant 0.000000e+00 : f32
    %13 = vector.broadcast %cst_8 : f32 to vector<8x32xf32>
    %14 = vector.extract_strided_slice %8 {offsets = [0, 0, 0], sizes = [1, 8, 8], strides = [1, 1, 1]} : vector<1x8x32xf32> to vector<1x8x8xf32>
    %15 = vector.extract_strided_slice %10 {offsets = [0, 0, 0], sizes = [1, 16, 8], strides = [1, 1, 1]} : vector<1x16x32xf32> to vector<1x16x8xf32>
    %16 = vector.extract_strided_slice %12 {offsets = [0, 0, 0], sizes = [1, 16, 8], strides = [1, 1, 1]} : vector<1x16x32xf32> to vector<1x16x8xf32>
    %17 = arith.truncf %14 : vector<1x8x8xf32> to vector<1x8x8xbf16>
    %18 = arith.truncf %15 : vector<1x16x8xf32> to vector<1x16x8xbf16>
    "tpu.trace_start"() <{level = 10 : i32, message = "bqd,bkd->bqk"}> : () -> ()
    %cst_9 = arith.constant dense<0.000000e+00> : vector<1x8x16xf32>
    %19 = tpu.matmul %17, %18, %cst_9 {dimension_numbers = #tpu.dot_dimension_numbers<[2], [2], [1], [1], [0, 0, 0, 1, 1, 1], [0], [0]>} : vector<1x8x8xbf16>, vector<1x16x8xbf16>, vector<1x8x16xf32> -> vector<1x8x16xf32>
    "tpu.trace_stop"() : () -> ()
    %cst_10 = arith.constant dense<0xFF800000> : vector<1x8xf32>
    %20 = vector.multi_reduction <maximumf>, %19, %cst_10 [2] : vector<1x8x16xf32> to vector<1x8xf32>
    %21 = vector.shape_cast %20 : vector<1x8xf32> to vector<1x8x1xf32>
    %22 = vector.broadcast %21 : vector<1x8x1xf32> to vector<1x8x16xf32>
    %23 = arith.subf %19, %22 : vector<1x8x16xf32>
    %24 = math.exp %23 : vector<1x8x16xf32>
    %cst_11 = arith.constant dense<0.000000e+00> : vector<1x8xf32>
    %25 = vector.multi_reduction <add>, %24, %cst_11 [2] : vector<1x8x16xf32> to vector<1x8xf32>
    %26 = vector.shape_cast %25 : vector<1x8xf32> to vector<1x8x1xf32>
    %27 = arith.truncf %24 : vector<1x8x16xf32> to vector<1x8x16xbf16>
    %28 = arith.truncf %16 : vector<1x16x8xf32> to vector<1x16x8xbf16>
    "tpu.trace_start"() <{level = 10 : i32, message = "bqk,bkd->bqd"}> : () -> ()
    %cst_12 = arith.constant dense<0.000000e+00> : vector<1x8x8xf32>
    %29 = tpu.matmul %27, %28, %cst_12 {dimension_numbers = #tpu.dot_dimension_numbers<[2], [1], [1], [2], [0, 0, 0, 1, 1, 2], [0], [0]>} : vector<1x8x16xbf16>, vector<1x16x8xbf16>, vector<1x8x8xf32> -> vector<1x8x8xf32>
    "tpu.trace_stop"() : () -> ()
    %30 = tpu.reciprocal %26 {approx = true} : vector<1x8x1xf32> -> vector<1x8x1xf32>
    %31 = vector.broadcast %30 : vector<1x8x1xf32> to vector<1x8x8xf32>
    %32 = arith.mulf %29, %31 : vector<1x8x8xf32>
    %c0_13 = arith.constant 0 : index
    %c0_14 = arith.constant 0 : index
    %c0_15 = arith.constant 0 : index
    %33 = vector.load %arg5[%c0_13, %c0_14, %c0_15] : memref<4x8x32xbf16, #tpu.memory_space<vmem>>, vector<1x8x32xbf16>
    %34 = vector.shape_cast %33 : vector<1x8x32xbf16> to vector<8x32xbf16>
    %35 = vector.shape_cast %32 : vector<1x8x8xf32> to vector<8x8xf32>
    %36 = arith.truncf %35 : vector<8x8xf32> to vector<8x8xbf16>
    %cst_16 = arith.constant dense<0.000000e+00> : vector<8x32xf32>
    %37 = tpu.matmul %36, %34, %cst_16 {dimension_numbers = #tpu.dot_dimension_numbers<[1], [0], [0], [1], [0, 0, 1, 1], [], []>} : vector<8x8xbf16>, vector<8x32xbf16>, vector<8x32xf32> -> vector<8x32xf32>
    %38 = arith.addf %13, %37 : vector<8x32xf32>
    %39 = vector.extract_strided_slice %8 {offsets = [0, 0, 8], sizes = [1, 8, 8], strides = [1, 1, 1]} : vector<1x8x32xf32> to vector<1x8x8xf32>
    %40 = vector.extract_strided_slice %10 {offsets = [0, 0, 8], sizes = [1, 16, 8], strides = [1, 1, 1]} : vector<1x16x32xf32> to vector<1x16x8xf32>
    %41 = vector.extract_strided_slice %12 {offsets = [0, 0, 8], sizes = [1, 16, 8], strides = [1, 1, 1]} : vector<1x16x32xf32> to vector<1x16x8xf32>
    %42 = arith.truncf %39 : vector<1x8x8xf32> to vector<1x8x8xbf16>
    %43 = arith.truncf %40 : vector<1x16x8xf32> to vector<1x16x8xbf16>
    "tpu.trace_start"() <{level = 10 : i32, message = "bqd,bkd->bqk"}> : () -> ()
    %cst_17 = arith.constant dense<0.000000e+00> : vector<1x8x16xf32>
    %44 = tpu.matmul %42, %43, %cst_17 {dimension_numbers = #tpu.dot_dimension_numbers<[2], [2], [1], [1], [0, 0, 0, 1, 1, 1], [0], [0]>} : vector<1x8x8xbf16>, vector<1x16x8xbf16>, vector<1x8x16xf32> -> vector<1x8x16xf32>
    "tpu.trace_stop"() : () -> ()
    %cst_18 = arith.constant dense<0xFF800000> : vector<1x8xf32>
    %45 = vector.multi_reduction <maximumf>, %44, %cst_18 [2] : vector<1x8x16xf32> to vector<1x8xf32>
    %46 = vector.shape_cast %45 : vector<1x8xf32> to vector<1x8x1xf32>
    %47 = vector.broadcast %46 : vector<1x8x1xf32> to vector<1x8x16xf32>
    %48 = arith.subf %44, %47 : vector<1x8x16xf32>
    %49 = math.exp %48 : vector<1x8x16xf32>
    %cst_19 = arith.constant dense<0.000000e+00> : vector<1x8xf32>
    %50 = vector.multi_reduction <add>, %49, %cst_19 [2] : vector<1x8x16xf32> to vector<1x8xf32>
    %51 = vector.shape_cast %50 : vector<1x8xf32> to vector<1x8x1xf32>
    %52 = arith.truncf %49 : vector<1x8x16xf32> to vector<1x8x16xbf16>
    %53 = arith.truncf %41 : vector<1x16x8xf32> to vector<1x16x8xbf16>
    "tpu.trace_start"() <{level = 10 : i32, message = "bqk,bkd->bqd"}> : () -> ()
    %cst_20 = arith.constant dense<0.000000e+00> : vector<1x8x8xf32>
    %54 = tpu.matmul %52, %53, %cst_20 {dimension_numbers = #tpu.dot_dimension_numbers<[2], [1], [1], [2], [0, 0, 0, 1, 1, 2], [0], [0]>} : vector<1x8x16xbf16>, vector<1x16x8xbf16>, vector<1x8x8xf32> -> vector<1x8x8xf32>
    "tpu.trace_stop"() : () -> ()
    %55 = tpu.reciprocal %51 {approx = true} : vector<1x8x1xf32> -> vector<1x8x1xf32>
    %56 = vector.broadcast %55 : vector<1x8x1xf32> to vector<1x8x8xf32>
    %57 = arith.mulf %54, %56 : vector<1x8x8xf32>
    %c1 = arith.constant 1 : index
    %c0_21 = arith.constant 0 : index
    %c0_22 = arith.constant 0 : index
    %58 = vector.load %arg5[%c1, %c0_21, %c0_22] : memref<4x8x32xbf16, #tpu.memory_space<vmem>>, vector<1x8x32xbf16>
    %59 = vector.shape_cast %58 : vector<1x8x32xbf16> to vector<8x32xbf16>
    %60 = vector.shape_cast %57 : vector<1x8x8xf32> to vector<8x8xf32>
    %61 = arith.truncf %60 : vector<8x8xf32> to vector<8x8xbf16>
    %cst_23 = arith.constant dense<0.000000e+00> : vector<8x32xf32>
    %62 = tpu.matmul %61, %59, %cst_23 {dimension_numbers = #tpu.dot_dimension_numbers<[1], [0], [0], [1], [0, 0, 1, 1], [], []>} : vector<8x8xbf16>, vector<8x32xbf16>, vector<8x32xf32> -> vector<8x32xf32>
    %63 = arith.addf %38, %62 : vector<8x32xf32>
    %64 = vector.extract_strided_slice %8 {offsets = [0, 0, 16], sizes = [1, 8, 8], strides = [1, 1, 1]} : vector<1x8x32xf32> to vector<1x8x8xf32>
    %65 = vector.extract_strided_slice %10 {offsets = [0, 0, 16], sizes = [1, 16, 8], strides = [1, 1, 1]} : vector<1x16x32xf32> to vector<1x16x8xf32>
    %66 = vector.extract_strided_slice %12 {offsets = [0, 0, 16], sizes = [1, 16, 8], strides = [1, 1, 1]} : vector<1x16x32xf32> to vector<1x16x8xf32>
    %67 = arith.truncf %64 : vector<1x8x8xf32> to vector<1x8x8xbf16>
    %68 = arith.truncf %65 : vector<1x16x8xf32> to vector<1x16x8xbf16>
    "tpu.trace_start"() <{level = 10 : i32, message = "bqd,bkd->bqk"}> : () -> ()
    %cst_24 = arith.constant dense<0.000000e+00> : vector<1x8x16xf32>
    %69 = tpu.matmul %67, %68, %cst_24 {dimension_numbers = #tpu.dot_dimension_numbers<[2], [2], [1], [1], [0, 0, 0, 1, 1, 1], [0], [0]>} : vector<1x8x8xbf16>, vector<1x16x8xbf16>, vector<1x8x16xf32> -> vector<1x8x16xf32>
    "tpu.trace_stop"() : () -> ()
    %cst_25 = arith.constant dense<0xFF800000> : vector<1x8xf32>
    %70 = vector.multi_reduction <maximumf>, %69, %cst_25 [2] : vector<1x8x16xf32> to vector<1x8xf32>
    %71 = vector.shape_cast %70 : vector<1x8xf32> to vector<1x8x1xf32>
    %72 = vector.broadcast %71 : vector<1x8x1xf32> to vector<1x8x16xf32>
    %73 = arith.subf %69, %72 : vector<1x8x16xf32>
    %74 = math.exp %73 : vector<1x8x16xf32>
    %cst_26 = arith.constant dense<0.000000e+00> : vector<1x8xf32>
    %75 = vector.multi_reduction <add>, %74, %cst_26 [2] : vector<1x8x16xf32> to vector<1x8xf32>
    %76 = vector.shape_cast %75 : vector<1x8xf32> to vector<1x8x1xf32>
    %77 = arith.truncf %74 : vector<1x8x16xf32> to vector<1x8x16xbf16>
    %78 = arith.truncf %66 : vector<1x16x8xf32> to vector<1x16x8xbf16>
    "tpu.trace_start"() <{level = 10 : i32, message = "bqk,bkd->bqd"}> : () -> ()
    %cst_27 = arith.constant dense<0.000000e+00> : vector<1x8x8xf32>
    %79 = tpu.matmul %77, %78, %cst_27 {dimension_numbers = #tpu.dot_dimension_numbers<[2], [1], [1], [2], [0, 0, 0, 1, 1, 2], [0], [0]>} : vector<1x8x16xbf16>, vector<1x16x8xbf16>, vector<1x8x8xf32> -> vector<1x8x8xf32>
    "tpu.trace_stop"() : () -> ()
    %80 = tpu.reciprocal %76 {approx = true} : vector<1x8x1xf32> -> vector<1x8x1xf32>
    %81 = vector.broadcast %80 : vector<1x8x1xf32> to vector<1x8x8xf32>
    %82 = arith.mulf %79, %81 : vector<1x8x8xf32>
    %c2 = arith.constant 2 : index
    %c0_28 = arith.constant 0 : index
    %c0_29 = arith.constant 0 : index
    %83 = vector.load %arg5[%c2, %c0_28, %c0_29] : memref<4x8x32xbf16, #tpu.memory_space<vmem>>, vector<1x8x32xbf16>
    %84 = vector.shape_cast %83 : vector<1x8x32xbf16> to vector<8x32xbf16>
    %85 = vector.shape_cast %82 : vector<1x8x8xf32> to vector<8x8xf32>
    %86 = arith.truncf %85 : vector<8x8xf32> to vector<8x8xbf16>
    %cst_30 = arith.constant dense<0.000000e+00> : vector<8x32xf32>
    %87 = tpu.matmul %86, %84, %cst_30 {dimension_numbers = #tpu.dot_dimension_numbers<[1], [0], [0], [1], [0, 0, 1, 1], [], []>} : vector<8x8xbf16>, vector<8x32xbf16>, vector<8x32xf32> -> vector<8x32xf32>
    %88 = arith.addf %63, %87 : vector<8x32xf32>
    %89 = vector.extract_strided_slice %8 {offsets = [0, 0, 24], sizes = [1, 8, 8], strides = [1, 1, 1]} : vector<1x8x32xf32> to vector<1x8x8xf32>
    %90 = vector.extract_strided_slice %10 {offsets = [0, 0, 24], sizes = [1, 16, 8], strides = [1, 1, 1]} : vector<1x16x32xf32> to vector<1x16x8xf32>
    %91 = vector.extract_strided_slice %12 {offsets = [0, 0, 24], sizes = [1, 16, 8], strides = [1, 1, 1]} : vector<1x16x32xf32> to vector<1x16x8xf32>
    %92 = arith.truncf %89 : vector<1x8x8xf32> to vector<1x8x8xbf16>
    %93 = arith.truncf %90 : vector<1x16x8xf32> to vector<1x16x8xbf16>
    "tpu.trace_start"() <{level = 10 : i32, message = "bqd,bkd->bqk"}> : () -> ()
    %cst_31 = arith.constant dense<0.000000e+00> : vector<1x8x16xf32>
    %94 = tpu.matmul %92, %93, %cst_31 {dimension_numbers = #tpu.dot_dimension_numbers<[2], [2], [1], [1], [0, 0, 0, 1, 1, 1], [0], [0]>} : vector<1x8x8xbf16>, vector<1x16x8xbf16>, vector<1x8x16xf32> -> vector<1x8x16xf32>
    "tpu.trace_stop"() : () -> ()
    %cst_32 = arith.constant dense<0xFF800000> : vector<1x8xf32>
    %95 = vector.multi_reduction <maximumf>, %94, %cst_32 [2] : vector<1x8x16xf32> to vector<1x8xf32>
    %96 = vector.shape_cast %95 : vector<1x8xf32> to vector<1x8x1xf32>
    %97 = vector.broadcast %96 : vector<1x8x1xf32> to vector<1x8x16xf32>
    %98 = arith.subf %94, %97 : vector<1x8x16xf32>
    %99 = math.exp %98 : vector<1x8x16xf32>
    %cst_33 = arith.constant dense<0.000000e+00> : vector<1x8xf32>
    %100 = vector.multi_reduction <add>, %99, %cst_33 [2] : vector<1x8x16xf32> to vector<1x8xf32>
    %101 = vector.shape_cast %100 : vector<1x8xf32> to vector<1x8x1xf32>
    %102 = arith.truncf %99 : vector<1x8x16xf32> to vector<1x8x16xbf16>
    %103 = arith.truncf %91 : vector<1x16x8xf32> to vector<1x16x8xbf16>
    "tpu.trace_start"() <{level = 10 : i32, message = "bqk,bkd->bqd"}> : () -> ()
    %cst_34 = arith.constant dense<0.000000e+00> : vector<1x8x8xf32>
    %104 = tpu.matmul %102, %103, %cst_34 {dimension_numbers = #tpu.dot_dimension_numbers<[2], [1], [1], [2], [0, 0, 0, 1, 1, 2], [0], [0]>} : vector<1x8x16xbf16>, vector<1x16x8xbf16>, vector<1x8x8xf32> -> vector<1x8x8xf32>
    "tpu.trace_stop"() : () -> ()
    %105 = tpu.reciprocal %101 {approx = true} : vector<1x8x1xf32> -> vector<1x8x1xf32>
    %106 = vector.broadcast %105 : vector<1x8x1xf32> to vector<1x8x8xf32>
    %107 = arith.mulf %104, %106 : vector<1x8x8xf32>
    %c3 = arith.constant 3 : index
    %c0_35 = arith.constant 0 : index
    %c0_36 = arith.constant 0 : index
    %108 = vector.load %arg5[%c3, %c0_35, %c0_36] : memref<4x8x32xbf16, #tpu.memory_space<vmem>>, vector<1x8x32xbf16>
    %109 = vector.shape_cast %108 : vector<1x8x32xbf16> to vector<8x32xbf16>
    %110 = vector.shape_cast %107 : vector<1x8x8xf32> to vector<8x8xf32>
    %111 = arith.truncf %110 : vector<8x8xf32> to vector<8x8xbf16>
    %cst_37 = arith.constant dense<0.000000e+00> : vector<8x32xf32>
    %112 = tpu.matmul %111, %109, %cst_37 {dimension_numbers = #tpu.dot_dimension_numbers<[1], [0], [0], [1], [0, 0, 1, 1], [], []>} : vector<8x8xbf16>, vector<8x32xbf16>, vector<8x32xf32> -> vector<8x32xf32>
    %113 = arith.addf %88, %112 : vector<8x32xf32>
    %c0_38 = arith.constant 0 : index
    %c0_39 = arith.constant 0 : index
    %114 = vector.load %arg6[%c0_38, %c0_39] : memref<1x32xf32, #tpu.memory_space<vmem>>, vector<1x32xf32>
    %115 = vector.broadcast %114 : vector<1x32xf32> to vector<8x32xf32>
    %116 = arith.addf %113, %115 : vector<8x32xf32>
    %c0_40 = arith.constant 0 : index
    %c0_41 = arith.constant 0 : index
    %117 = vector.load %arg7[%c0_40, %c0_41] : memref<8x32xf32, #tpu.memory_space<vmem>>, vector<8x32xf32>
    tpu.vector_store %arg7[%c0_40, %c0_41], %116 {strides = array<i32>} : memref<8x32xf32, #tpu.memory_space<vmem>>, vector<8x32xf32>,
    return
  }
  func.func @transform_0(%arg0: i32) -> (i32, i32) {
    %c0_i32 = arith.constant 0 : i32
    %c0_i32_0 = arith.constant 0 : i32
    return %arg0, %c0_i32 : i32, i32
  }
  func.func @transform_1(%arg0: i32) -> (i32, i32) {
    %c0_i32 = arith.constant 0 : i32
    %c0_i32_0 = arith.constant 0 : i32
    return %arg0, %c0_i32 : i32, i32
  }
  func.func @transform_2(%arg0: i32) -> (i32, i32) {
    %c0_i32 = arith.constant 0 : i32
    %c0_i32_0 = arith.constant 0 : i32
    %c0_i32_1 = arith.constant 0 : i32
    return %c0_i32, %c0_i32_0 : i32, i32
  }
  func.func @transform_3(%arg0: i32) -> (i32, i32) {
    %c0_i32 = arith.constant 0 : i32
    %c0_i32_0 = arith.constant 0 : i32
    %c0_i32_1 = arith.constant 0 : i32
    return %c0_i32, %c0_i32_0 : i32, i32
  }
  func.func @transform_4(%arg0: i32) -> (i32, i32, i32) {
    %c0_i32 = arith.constant 0 : i32
    %c0_i32_0 = arith.constant 0 : i32
    %c0_i32_1 = arith.constant 0 : i32
    %c0_i32_2 = arith.constant 0 : i32
    return %c0_i32, %c0_i32_0, %c0_i32_1 : i32, i32, i32
  }
  func.func @transform_5(%arg0: i32) -> (i32, i32) {
    %c0_i32 = arith.constant 0 : i32
    %c0_i32_0 = arith.constant 0 : i32
    %c0_i32_1 = arith.constant 0 : i32
    return %c0_i32, %c0_i32_0 : i32, i32
  }
  func.func @transform_6(%arg0: i32) -> (i32, i32) {
    %c0_i32 = arith.constant 0 : i32
    %c0_i32_0 = arith.constant 0 : i32
    return %arg0, %c0_i32 : i32, i32
  }
}

</mosaic_0001>

<llo_original>
// kernel: tpu_custom_call.1
$region0: #{tpu_custom_call.1}
  #allocation0 [shape = 'u32[]', space=smem, size = 0x4, offset = 0x4, fixed_abs, tag = 'smem constant byte address 0x4 - core index']
  #allocation1 [shape = 'u32[72,128]{1,0:T(1,128)}', space=vmem, size = 0x9000, scoped, tag = 'internal scratch']
  %s0 = inlined_call_operand.hbm [shape: f32[16,32], index: 0, kind: input, shape index: {}]
  %s1 = inlined_call_operand.hbm [shape: f32[32,32], index: 1, kind: input, shape index: {}]
  %s2 = inlined_call_operand.hbm [shape: bf16[32,32], index: 2, kind: input, shape index: {}]
  %s3 = inlined_call_operand.hbm [shape: bf16[32,64], index: 3, kind: input, shape index: {}]
  %s4 = inlined_call_operand.hbm [shape: bf16[4,8,32], index: 4, kind: input, shape index: {}]
  %s5 = inlined_call_operand.vmem [shape: f32[1,32], index: 5, kind: input, shape index: {}]
  %s6 = inlined_call_operand.hbm [shape: f32[16,32], index: 6, kind: output, shape index: {}]
  %s7 = sld [smem:[#allocation0]]
  $region77: #{tpu_custom_call.1} parent=0
    _
  %s9 = ssub.s32 1, %s7
  %s10 = scalar_select 0, %s9, %s7
  $region1: #{tpu_custom_call.1} parent=0
    #allocation2 [shape = 'u8[8192]{0}', space=vmem, size = 0x2000, scoped, tag = 'input window, operand 0']
    #allocation3 [shape = 's32[2]{0}', space=sflag, size = 0x8, scoped, tag = 'scoped memory for tpu_custom_call.1']
    #allocation4 [shape = 's32[2]{0}', space=sflag, size = 0x8, scoped, tag = 'scoped memory for tpu_custom_call.1']
    #allocation5 [shape = 'u8[16384]{0}', space=vmem, size = 0x4000, scoped, tag = 'input window, operand 1']
    #allocation6 [shape = 's32[2]{0}', space=sflag, size = 0x8, scoped, tag = 'scoped memory for tpu_custom_call.1']
    #allocation7 [shape = 'u8[8192]{0}', space=vmem, size = 0x2000, scoped, tag = 'input window, operand 2, single buffered']
    #allocation8 [shape = 'u8[8192]{0}', space=vmem, size = 0x2000, scoped, tag = 'input window, operand 3, single buffered']
    #allocation9 [shape = 's32[1]{0}', space=sflag, size = 0x4, scoped, tag = 'scoped memory for tpu_custom_call.1']
    #allocation10 [shape = 'u8[8192]{0}', space=vmem, size = 0x2000, scoped, tag = 'input window, operand 4, single buffered']
    #allocation11 [shape = 'u8[8192]{0}', space=vmem, size = 0x2000, scoped, tag = 'output window, operand 0']
    %11 = vsyncpa [#allocation3], 0
    %s12 = scalar_lea.sflag [#allocation3], 1
    %13 = vsyncpa %s12, 0
    %14 = vsyncpa [#allocation6], 0
    %s15 = scalar_lea.sflag [#allocation6], 1
    %16 = vsyncpa %s15, 0
    %17 = vsyncpa [#allocation9], 0
    %18 = vsyncpa [#allocation4], 0
    %s19 = scalar_lea.sflag [#allocation4], 1
    %20 = vsyncpa %s19, 0
    loop: start=0, step=1, limit=4
    $region2: #{tpu_custom_call.1} parent=1 // loop_pre_header
      _
    $region3: #{tpu_custom_call.1} parent=1 // loop_header
      %s22 = sphi 0, %s26
      %p23 = scmp.ge.s32.totalorder %s22, 4
      %s32 = sphi 0, %s34
      %s35 = sphi 0, %s32
      %s36 = sphi 0, %s35
      %s52 = sphi 0, %s36
      %s58 = sphi 0, %s60
      %s61 = sphi 0, %s58
      %s62 = sphi 0, %s61
      %s78 = sphi 0, %s62
      %s82 = sphi 0, %s82
      %s84 = sphi 0, %s82
      %s85 = sphi 0, %s84
      %s99 = sphi 0, %s85
      %s103 = sphi 0, %s103
      %s105 = sphi 0, %s103
      %s106 = sphi 0, %s105
      %s120 = sphi 0, %s106
      %s124 = sphi 0, %s124
      %s126 = sphi 0, %s124
      %s127 = sphi 0, %s126
      %s141 = sphi 0, %s127
      %s145 = sphi 0, %s145
      %s147 = sphi 0, %s145
      %s148 = sphi 0, %s147
      %s162 = sphi 0, %s148
      %s168 = sphi 0, %s170
      %s171 = sphi 0, %s168
      %s172 = sphi 0, %s171
      %s188 = sphi 0, %s172
    $region4: #{tpu_custom_call.1} parent=1 // loop_header_branch
      %25 = sbr.rel (%p23) target = $region8
    $region5: #{tpu_custom_call.1} parent=1 // loop_body
      %s27 = ssub.s32 %s22, 1
      %s28 = ssub.s32 %s22, 2
      %s29 = sadd.s32 %s22, 1
      %s30 = ssub.s32 %s22, %s29
      %p31 = scmp.eq.s32.totalorder %s30, 0
      %s33 = sadd.s32 %s32, 1
      %s34 = scalar_select %p31, %s32, %s33
      %p37 = pneg %p31
      %p38 = scmp.eq.s32.totalorder %s22, 1
      %p39 = por %p37, %p38
      %p40 = scmp.ne.s32.totalorder %s32, %s35
      %p41 = scmp.eq.s32.totalorder %s22, 0
      %p42 = por %p40, %p41
      %p43 = scmp.ne.s32.totalorder %s32, %s35
      %p44 = scmp.eq.s32.totalorder %s27, 1
      %p45 = por %p43, %p44
      %p46 = scmp.ne.s32.totalorder %s35, %s36
      %p47 = scmp.eq.s32.totalorder %s27, 0
      %p48 = por %p46, %p47
      %p49 = scmp.ne.s32.totalorder %s35, %s36
      %p50 = scmp.eq.s32.totalorder %s28, 1
      %p51 = por %p49, %p50
      %p53 = scmp.ne.s32.totalorder %s36, %s52
      %p54 = scmp.eq.s32.totalorder %s28, 0
      %p55 = por %p53, %p54
      %s56 = ssub.s32 %s22, %s29
      %p57 = scmp.eq.s32.totalorder %s56, 0
      %s59 = sadd.s32 %s58, 1
      %s60 = scalar_select %p57, %s58, %s59
      %p63 = pneg %p57
      %p64 = scmp.eq.s32.totalorder %s22, 1
      %p65 = por %p63, %p64
      %p66 = scmp.ne.s32.totalorder %s58, %s61
      %p67 = scmp.eq.s32.totalorder %s22, 0
      %p68 = por %p66, %p67
      %p69 = scmp.ne.s32.totalorder %s58, %s61
      %p70 = scmp.eq.s32.totalorder %s27, 1
      %p71 = por %p69, %p70
      %p72 = scmp.ne.s32.totalorder %s61, %s62
      %p73 = scmp.eq.s32.totalorder %s27, 0
      %p74 = por %p72, %p73
      %p75 = scmp.ne.s32.totalorder %s61, %s62
      %p76 = scmp.eq.s32.totalorder %s28, 1
      %p77 = por %p75, %p76
      %p79 = scmp.ne.s32.totalorder %s62, %s78
      %p80 = scmp.eq.s32.totalorder %s28, 0
      %p81 = por %p79, %p80
      %s83 = sadd.s32 %s82, 1
      %p86 = scmp.eq.s32.totalorder %s22, 1
      %p87 = scmp.ne.s32.totalorder %s82, %s84
      %p88 = scmp.eq.s32.totalorder %s22, 0
      %p89 = por %p87, %p88
      %p90 = scmp.ne.s32.totalorder %s82, %s84
      %p91 = scmp.eq.s32.totalorder %s27, 1
      %p92 = por %p90, %p91
      %p93 = scmp.ne.s32.totalorder %s84, %s85
      %p94 = scmp.eq.s32.totalorder %s27, 0
      %p95 = por %p93, %p94
      %p96 = scmp.ne.s32.totalorder %s84, %s85
      %p97 = scmp.eq.s32.totalorder %s28, 1
      %p98 = por %p96, %p97
      %p100 = scmp.ne.s32.totalorder %s85, %s99
      %p101 = scmp.eq.s32.totalorder %s28, 0
      %p102 = por %p100, %p101
      %s104 = sadd.s32 %s103, 1
      %p107 = scmp.eq.s32.totalorder %s22, 1
      %p108 = scmp.ne.s32.totalorder %s103, %s105
      %p109 = scmp.eq.s32.totalorder %s22, 0
      %p110 = por %p108, %p109
      %p111 = scmp.ne.s32.totalorder %s103, %s105
      %p112 = scmp.eq.s32.totalorder %s27, 1
      %p113 = por %p111, %p112
      %p114 = scmp.ne.s32.totalorder %s105, %s106
      %p115 = scmp.eq.s32.totalorder %s27, 0
      %p116 = por %p114, %p115
      %p117 = scmp.ne.s32.totalorder %s105, %s106
      %p118 = scmp.eq.s32.totalorder %s28, 1
      %p119 = por %p117, %p118
      %p121 = scmp.ne.s32.totalorder %s106, %s120
      %p122 = scmp.eq.s32.totalorder %s28, 0
      %p123 = por %p121, %p122
      %s125 = sadd.s32 %s124, 1
      %p128 = scmp.eq.s32.totalorder %s22, 1
      %p129 = scmp.ne.s32.totalorder %s124, %s126
      %p130 = scmp.eq.s32.totalorder %s22, 0
      %p131 = por %p129, %p130
      %p132 = scmp.ne.s32.totalorder %s124, %s126
      %p133 = scmp.eq.s32.totalorder %s27, 1
      %p134 = por %p132, %p133
      %p135 = scmp.ne.s32.totalorder %s126, %s127
      %p136 = scmp.eq.s32.totalorder %s27, 0
      %p137 = por %p135, %p136
      %p138 = scmp.ne.s32.totalorder %s126, %s127
      %p139 = scmp.eq.s32.totalorder %s28, 1
      %p140 = por %p138, %p139
      %p142 = scmp.ne.s32.totalorder %s127, %s141
      %p143 = scmp.eq.s32.totalorder %s28, 0
      %p144 = por %p142, %p143
      %s146 = sadd.s32 %s145, 1
      %p149 = scmp.eq.s32.totalorder %s22, 1
      %p150 = scmp.ne.s32.totalorder %s145, %s147
      %p151 = scmp.eq.s32.totalorder %s22, 0
      %p152 = por %p150, %p151
      %p153 = scmp.ne.s32.totalorder %s145, %s147
      %p154 = scmp.eq.s32.totalorder %s27, 1
      %p155 = por %p153, %p154
      %p156 = scmp.ne.s32.totalorder %s147, %s148
      %p157 = scmp.eq.s32.totalorder %s27, 0
      %p158 = por %p156, %p157
      %p159 = scmp.ne.s32.totalorder %s147, %s148
      %p160 = scmp.eq.s32.totalorder %s28, 1
      %p161 = por %p159, %p160
      %p163 = scmp.ne.s32.totalorder %s148, %s162
      %p164 = scmp.eq.s32.totalorder %s28, 0
      %p165 = por %p163, %p164
      %s166 = ssub.s32 %s22, %s29
      %p167 = scmp.eq.s32.totalorder %s166, 0
      %s169 = sadd.s32 %s168, 1
      %s170 = scalar_select %p167, %s168, %s169
      %p173 = pneg %p167
      %p174 = scmp.eq.s32.totalorder %s22, 1
      %p175 = por %p173, %p174
      %p176 = scmp.ne.s32.totalorder %s168, %s171
      %p177 = scmp.eq.s32.totalorder %s22, 0
      %p178 = por %p176, %p177
      %p179 = scmp.ne.s32.totalorder %s168, %s171
      %p180 = scmp.eq.s32.totalorder %s27, 1
      %p181 = por %p179, %p180
      %p182 = scmp.ne.s32.totalorder %s171, %s172
      %p183 = scmp.eq.s32.totalorder %s27, 0
      %p184 = por %p182, %p183
      %p185 = scmp.ne.s32.totalorder %s171, %s172
      %p186 = scmp.eq.s32.totalorder %s28, 1
      %p187 = por %p185, %p186
      %p189 = scmp.ne.s32.totalorder %s172, %s188
      %p190 = scmp.eq.s32.totalorder %s28, 0
      %p191 = por %p189, %p190
      %p192 = scmp.le.s32.totalorder 1, %s22
      %p193 = scmp.lt.s32.totalorder %s22, 3
      %p194 = pnand %p192, %p193
      %p195 = pneg %p194
      // Predicated region
      $region9: #{tpu_custom_call.1} parent=5 // pred_check
        _
      $region10: #{tpu_custom_call.1} parent=5 // pred_check_branch
        %197 = sbr.rel (%p194) target = $region12
      $region11: #{tpu_custom_call.1} parent=5 // pred_region
        %s198 = ssub.s32 %s22, 1
        // Predicated region
        $region13: #{tpu_custom_call.1} parent=11 // pred_check
          %p199 = pneg %p95
        $region14: #{tpu_custom_call.1} parent=11 // pred_check_branch
          %201 = sbr.rel (%p199) target = $region16
        $region15: #{tpu_custom_call.1} parent=11 // pred_region
          %203 = vsyncadd [#allocation6], 0
          %s204 = sshll.u32 %s2, 4
          %s205 = int_to_ptr.hbm [resolvable:$true] %s204
          %s206 = sshll.u32 [#allocation7], 4
          %s207 = int_to_ptr.vmem [resolvable:$true] %s206
          %212 = dma.hbm_to_vmem [thread:$0]  %s205, 256, %s207, [#allocation6], 64, 64, 4
        $region16: #{tpu_custom_call.1} parent=11 // pred_fallthru
          _
        // Predicated region
        $region17: #{tpu_custom_call.1} parent=11 // pred_check
          %p213 = pneg %p116
        $region18: #{tpu_custom_call.1} parent=11 // pred_check_branch
          %215 = sbr.rel (%p213) target = $region20
        $region19: #{tpu_custom_call.1} parent=11 // pred_region
          %217 = vsyncadd [#allocation9], 0
          %s218 = sshll.u32 %s3, 4
          %s219 = int_to_ptr.hbm [resolvable:$true] %s218
          %s220 = sshll.u32 [#allocation8], 4
          %s221 = int_to_ptr.vmem [resolvable:$true] %s220
          %226 = dma.hbm_to_vmem [thread:$0]  %s219, 256, %s221, [#allocation9], 64, 64, 4
        $region20: #{tpu_custom_call.1} parent=11 // pred_fallthru
          _
        // Predicated region
        $region21: #{tpu_custom_call.1} parent=11 // pred_check
          %p227 = pneg %p137
        $region22: #{tpu_custom_call.1} parent=11 // pred_check_branch
          %229 = sbr.rel (%p227) target = $region24
        $region23: #{tpu_custom_call.1} parent=11 // pred_region
          %231 = vsyncadd [#allocation9], 0
          %s232 = sshll.u32 %s4, 4
          %s233 = int_to_ptr.hbm [resolvable:$true] %s232
          %s234 = sshll.u32 [#allocation10], 4
          %s235 = int_to_ptr.vmem [resolvable:$true] %s234
          %240 = dma.hbm_to_vmem [thread:$0]  %s233, 256, %s235, [#allocation9], 64, 64, 4
        $region24: #{tpu_custom_call.1} parent=11 // pred_fallthru
          _
        // Predicated region
        $region25: #{tpu_custom_call.1} parent=11 // pred_check
          %p241 = pneg %p158
        $region26: #{tpu_custom_call.1} parent=11 // pred_check_branch
          %243 = sbr.rel (%p241) target = $region28
        $region27: #{tpu_custom_call.1} parent=11 // pred_region
          _
        $region28: #{tpu_custom_call.1} parent=11 // pred_fallthru
          _
      $region12: #{tpu_custom_call.1} parent=5 // pred_fallthru
        _
      %p244 = scmp.lt.s32.totalorder %s22, 2
      // Predicated region
      $region29: #{tpu_custom_call.1} parent=5 // pred_check
        %p245 = pneg %p244
      $region30: #{tpu_custom_call.1} parent=5 // pred_check_branch
        %247 = sbr.rel (%p245) target = $region32
      $region31: #{tpu_custom_call.1} parent=5 // pred_region
        // Predicated region
        $region33: #{tpu_custom_call.1} parent=31 // pred_check
          %p248 = pneg %p42
        $region34: #{tpu_custom_call.1} parent=31 // pred_check_branch
          %250 = sbr.rel (%p248) target = $region36
        $region35: #{tpu_custom_call.1} parent=31 // pred_region
          %s251 = sand.u32 %s32, 1
          %s252 = scalar_lea.sflag [#allocation3], %s251
          %s253 = sand.u32 %s32, 1
          %s254 = smul.addr %s253, 8
          %s255 = scalar_lea.vmem [#allocation2], %s254
          %257 = vsyncadd %s252, 0
          %s258 = smul.addr %s22, 8
          %s259 = scalar_lea.hbm %s0, %s258
          %s261 = sshll.u32 %s259, 4
          %s262 = int_to_ptr.hbm [resolvable:$true] %s261
          %s263 = sshll.u32 %s255, 4
          %s264 = int_to_ptr.vmem [resolvable:$true] %s263
          %266 = dma.hbm_to_vmem [thread:$0]  %s262, 128, %s264, %s252
        $region36: #{tpu_custom_call.1} parent=31 // pred_fallthru
          _
        // Predicated region
        $region37: #{tpu_custom_call.1} parent=31 // pred_check
          %p267 = pneg %p68
        $region38: #{tpu_custom_call.1} parent=31 // pred_check_branch
          %269 = sbr.rel (%p267) target = $region40
        $region39: #{tpu_custom_call.1} parent=31 // pred_region
          %s270 = sand.u32 %s22, 1
          %s271 = scalar_lea.sflag [#allocation6], %s270
          %s272 = sand.u32 %s58, 1
          %s273 = smul.addr %s272, 16
          %s274 = scalar_lea.vmem [#allocation5], %s273
          %s275 = smul.u32 2, %s22
          %277 = vsyncadd %s271, 0
          %s278 = smul.addr %s275, 8
          %s279 = scalar_lea.hbm %s1, %s278
          %s280 = sshll.u32 %s279, 4
          %s281 = int_to_ptr.hbm [resolvable:$true] %s280
          %s282 = sshll.u32 %s274, 4
          %s283 = int_to_ptr.vmem [resolvable:$true] %s282
          %288 = dma.hbm_to_vmem [thread:$0]  %s281, 256, %s283, %s271, 128, 128, 8
        $region40: #{tpu_custom_call.1} parent=31 // pred_fallthru
          _
      $region32: #{tpu_custom_call.1} parent=5 // pred_fallthru
        _
      %p289 = scmp.le.s32.totalorder 1, %s22
      %p290 = scmp.lt.s32.totalorder %s22, 3
      %p291 = pnand %p289, %p290
      %p292 = pneg %p291
      // Predicated region
      $region41: #{tpu_custom_call.1} parent=5 // pred_check
        _
      $region42: #{tpu_custom_call.1} parent=5 // pred_check_branch
        %294 = sbr.rel (%p291) target = $region44
      $region43: #{tpu_custom_call.1} parent=5 // pred_region
        %s295 = ssub.s32 %s22, 1
        %s296 = sand.u32 %s35, 1
        %s297 = scalar_lea.sflag [#allocation3], %s296
        %s298 = sand.u32 %s35, 1
        %s299 = smul.addr %s298, 8
        %s300 = scalar_lea.vmem [#allocation2], %s299
        // Predicated region
        $region45: #{tpu_custom_call.1} parent=43 // pred_check
          %p301 = pneg %p48
        $region46: #{tpu_custom_call.1} parent=43 // pred_check_branch
          %303 = sbr.rel (%p301) target = $region48
        $region47: #{tpu_custom_call.1} parent=43 // pred_region
          %305 = dma.done %s297, 128
        $region48: #{tpu_custom_call.1} parent=43 // pred_fallthru
          _
        %s306 = sand.u32 %s27, 1
        %s307 = scalar_lea.sflag [#allocation6], %s306
        %s308 = sand.u32 %s61, 1
        %s309 = smul.addr %s308, 16
        %s310 = scalar_lea.vmem [#allocation5], %s309
        // Predicated region
        $region49: #{tpu_custom_call.1} parent=43 // pred_check
          %p311 = pneg %p74
        $region50: #{tpu_custom_call.1} parent=43 // pred_check_branch
          %313 = sbr.rel (%p311) target = $region52
        $region51: #{tpu_custom_call.1} parent=43 // pred_region
          %315 = dma.done %s307, 256
        $region52: #{tpu_custom_call.1} parent=43 // pred_fallthru
          _
        // Predicated region
        $region53: #{tpu_custom_call.1} parent=43 // pred_check
          %p316 = pneg %p95
        $region54: #{tpu_custom_call.1} parent=43 // pred_check_branch
          %318 = sbr.rel (%p316) target = $region56
        $region55: #{tpu_custom_call.1} parent=43 // pred_region
          %320 = dma.done [#allocation6], 256
        $region56: #{tpu_custom_call.1} parent=43 // pred_fallthru
          _
        // Predicated region
        $region57: #{tpu_custom_call.1} parent=43 // pred_check
          %p321 = pneg %p116
        $region58: #{tpu_custom_call.1} parent=43 // pred_check_branch
          %323 = sbr.rel (%p321) target = $region60
        $region59: #{tpu_custom_call.1} parent=43 // pred_region
          %325 = dma.done [#allocation9], 256
        $region60: #{tpu_custom_call.1} parent=43 // pred_fallthru
          _
        // Predicated region
        $region61: #{tpu_custom_call.1} parent=43 // pred_check
          %p326 = pneg %p137
        $region62: #{tpu_custom_call.1} parent=43 // pred_check_branch
          %328 = sbr.rel (%p326) target = $region64
        $region63: #{tpu_custom_call.1} parent=43 // pred_region
          %330 = dma.done [#allocation9], 256
        $region64: #{tpu_custom_call.1} parent=43 // pred_fallthru
          _
        %s331 = sand.u32 %s35, 1
        %s332 = scalar_lea.sflag [#allocation3], %s331
        %s333 = sand.u32 %s35, 1
        %s334 = smul.addr %s333, 8
        %s335 = scalar_lea.vmem [#allocation2], %s334
        %p336 = pneg %p48
        %p337 = pneg %p45
        %s338 = sand.u32 %s27, 1
        %s339 = scalar_lea.sflag [#allocation6], %s338
        %s340 = sand.u32 %s61, 1
        %s341 = smul.addr %s340, 16
        %s342 = scalar_lea.vmem [#allocation5], %s341
        %p343 = pneg %p74
        %p344 = pneg %p71
        %p345 = pneg %p95
        %p346 = pneg %p92
        %p347 = pneg %p116
        %p348 = pneg %p113
        %p349 = pneg %p137
        %p350 = pneg %p134
        %p351 = pneg %p158
        %p352 = pneg %p155
        %p353 = pneg %p184
        %p354 = pneg %p181
        %s355 = sand.u32 %s171, 1
        %s356 = scalar_lea.sflag [#allocation4], %s355
        %s357 = sand.u32 %s171, 1
        %s358 = smul.addr %s357, 8
        %s359 = scalar_lea.vmem [#allocation11], %s358
        %s360 = smul.u32 2, %s27
        %v362 = vld [vmem:[%s300] sm:$0xff]
        %v363 = vpack.c.bf16 %v362, %v362
        %v364 = vld [vmem:[#allocation7] sm:$0xf]
        %v365 = vld [vmem:[#allocation7 + $0x4] sm:$0xf]
        %v366 = vld [vmem:[#allocation7 + $0x8] sm:$0xf]
        %v367 = vld [vmem:[#allocation7 + $0xc] sm:$0xf]
        %v372 = vunpack.c.l.b16 %v364
        %v373 = vunpack.c.l.b16 %v365
        %v374 = vunpack.c.l.b16 %v366
        %v375 = vunpack.c.l.b16 %v367
        %v376 = vpack.c.b16 %v373, %v372
        %v377 = vpack.c.b16 %v375, %v374
        %vm380 = vcmask 261120
        %v382 = vsel %vm380, %v363, 0
        %384 = vmatpush.bf16.msra.mxu0 0
        %385 = vmatpush.bf16.msra.mxu0 0
        %386 = vmatpush.bf16.msra.mxu0 0
        %387 = vmatpush.bf16.msra.mxu0 0
        %388 = vmatpush.bf16.msra.mxu0 0
        %389 = vmatpush.bf16.msra.mxu0 0
        %390 = vmatpush.bf16.msra.mxu0 %v377
        %391 = vmatpush.bf16.msra.mxu0 %v376
        %392 = vmatmul.bf16.gmra.mxu0 %v382
        %v393 = vpop.f32.mrf.mxu0
        %v394 = vadd.f32 0.0, %v393
        %v395 = vpop.f32.mrf.mxu0
        %396 = vdwg.mxu0
        %v397 = vld [vmem:[%s310] sm:$0xff]
        %v398 = vld [vmem:[%s310 + $0x8] sm:$0xff]
        %v399 = vpack.c.bf16 %v398, %v397
        %v400 = vld [vmem:[#allocation8] sm:$0xf]
        %v401 = vld [vmem:[#allocation8 + $0x4] sm:$0xf]
        %v402 = vld [vmem:[#allocation8 + $0x8] sm:$0xf]
        %v403 = vld [vmem:[#allocation8 + $0xc] sm:$0xf]
        %v408 = vunpack.c.l.b16 %v400
        %v409 = vunpack.c.l.b16 %v401
        %v410 = vunpack.c.l.b16 %v402
        %v411 = vunpack.c.l.b16 %v403
        %v412 = vpack.c.b16 %v409, %v408
        %v413 = vpack.c.b16 %v411, %v410
        %v417 = vsel %vm380, %v399, 0
        %419 = vmatpush.bf16.msra.mxu0 0
        %420 = vmatpush.bf16.msra.mxu0 0
        %421 = vmatpush.bf16.msra.mxu0 0
        %422 = vmatpush.bf16.msra.mxu0 0
        %423 = vmatpush.bf16.msra.mxu0 0
        %424 = vmatpush.bf16.msra.mxu0 0
        %425 = vmatpush.bf16.msra.mxu0 %v413
        %426 = vmatpush.bf16.msra.mxu0 %v412
        %427 = vmatmul.bf16.gmra.mxu0 %v417
        %v428 = vpop.f32.mrf.mxu0
        %v429 = vadd.f32 0.0, %v428
        %v430 = vpop.f32.mrf.mxu0
        %v431 = vadd.f32 0.0, %v430
        %432 = vdwg.mxu0
        %v433 = vpack.c.bf16 %v394, %v394
        %v434 = vpack.c.bf16 %v429, %v429
        %v435 = vpack.c.bf16 %v431, %v431
        %v438 = vunpack.c.l.b16 %v434
        %v439 = vunpack.c.l.b16 %v435
        %v440 = vpack.c.b16 %v439, %v438
        %vm441 = vcmask 64512
        %v443 = vsel %vm441, %v433, 0
        %v446 = vsel %vm441, %v440, 0
        %448 = vmatpush.bf16.xpose.msra.mxu0 0
        %449 = vmatpush.bf16.xpose.msra.mxu0 0
        %450 = vmatpush.bf16.xpose.msra.mxu0 0
        %451 = vmatpush.bf16.xpose.msra.mxu0 0
        %452 = vmatpush.bf16.xpose.msra.mxu0 0
        %453 = vmatpush.bf16.xpose.msra.mxu0 0
        %454 = vmatpush.bf16.xpose.msra.mxu0 0
        %455 = vmatpush.bf16.xpose.msra.mxu0 %v446
        %456 = vmatmul.bf16.gmra.mxu0 %v443
        %v457 = vpop.f32.mrf.mxu0
        %v458 = vadd.f32 0.0, %v457
        %v459 = vpop.f32.mrf.mxu0
        %460 = vdwg.mxu0
        %vm461 = vcmask 130048
        %v462 = vsel %vm461, %v458, -inf
        %463 = vmax.xlane.f32.xlu0 %v462
        %v464 = vpop.xlane.xlu0 %463
        %v465 = vsub.f32 %v458, %v464
        %v466 = vmul.f32 %v465, 1.442695
        %v467 = vpow.pop %v466
        %v468 = vsel %vm461, %v467, 0.0
        %469 = vadd.xlane.f32.xlu0 %v468
        %v470 = vpop.xlane.xlu0 %469
        %v471 = vpack.c.bf16 %v467, %v467
        %472 = vrot.lane.b32.xlu0 %v440, 96
        %v473 = vpop.permute.xlu0 %472
        %v476 = vsel %vm461, %v471, 0
        %478 = vmatpush.bf16.msra.mxu0 0
        %479 = vmatpush.bf16.msra.mxu0 0
        %480 = vmatpush.bf16.msra.mxu0 0
        %481 = vmatpush.bf16.msra.mxu0 0
        %482 = vmatpush.bf16.msra.mxu0 0
        %483 = vmatpush.bf16.msra.mxu0 0
        %484 = vmatpush.bf16.msra.mxu0 0
        %485 = vmatpush.bf16.msra.mxu0 %v473
        %486 = vmatmul.bf16.gmra.mxu0 %v476
        %v487 = vpop.f32.mrf.mxu0
        %v488 = vadd.f32 0.0, %v487
        %v489 = vpop.f32.mrf.mxu0
        %490 = vdwg.mxu0
        %v491 = vrcp.pop %v470
        %v492 = vmul.f32 %v488, %v491
        %v493 = vld [vmem:[#allocation10] sm:$0xf]
        %v494 = vpack.c.bf16 %v492, %v492
        %v496 = vunpack.c.l.b16 %v433
        %v497 = vpack.c.b16 %v496, %v496
        %498 = vrot.lane.b32.xlu0 %v497, 120
        %v499 = vpop.permute.xlu0 %498
        %500 = vrot.lane.b32.xlu0 %v440, 120
        %v501 = vpop.permute.xlu0 %500
        %v503 = vsel %vm441, %v499, 0
        %v506 = vsel %vm441, %v501, 0
        %508 = vmatpush.bf16.xpose.msra.mxu0 0
        %509 = vmatpush.bf16.xpose.msra.mxu0 0
        %510 = vmatpush.bf16.xpose.msra.mxu0 0
        %511 = vmatpush.bf16.xpose.msra.mxu0 0
        %512 = vmatpush.bf16.xpose.msra.mxu0 0
        %513 = vmatpush.bf16.xpose.msra.mxu0 0
        %514 = vmatpush.bf16.xpose.msra.mxu0 0
        %515 = vmatpush.bf16.xpose.msra.mxu0 %v506
        %516 = vmatmul.bf16.gmra.mxu0 %v503
        %v517 = vpop.f32.mrf.mxu0
        %v518 = vadd.f32 0.0, %v517
        %v519 = vpop.f32.mrf.mxu0
        %520 = vdwg.mxu0
        %v521 = vsel %vm461, %v518, -inf
        %522 = vmax.xlane.f32.xlu0 %v521
        %v523 = vpop.xlane.xlu0 %522
        %v524 = vsub.f32 %v518, %v523
        %v525 = vmul.f32 %v524, 1.442695
        %v526 = vpow.pop %v525
        %v527 = vsel %vm461, %v526, 0.0
        %528 = vadd.xlane.f32.xlu0 %v527
        %v529 = vpop.xlane.xlu0 %528
        %v530 = vpack.c.bf16 %v526, %v526
        %531 = vrot.lane.b32.xlu0 %v440, 88
        %v532 = vpop.permute.xlu0 %531
        %v535 = vsel %vm461, %v530, 0
        %537 = vmatpush.bf16.msra.mxu0 0
        %538 = vmatpush.bf16.msra.mxu0 0
        %539 = vmatpush.bf16.msra.mxu0 0
        %540 = vmatpush.bf16.msra.mxu0 0
        %541 = vmatpush.bf16.msra.mxu0 0
        %542 = vmatpush.bf16.msra.mxu0 0
        %543 = vmatpush.bf16.msra.mxu0 0
        %544 = vmatpush.bf16.msra.mxu0 %v532
        %545 = vmatmul.bf16.gmra.mxu0 %v535
        %v546 = vpop.f32.mrf.mxu0
        %v547 = vadd.f32 0.0, %v546
        %v548 = vpop.f32.mrf.mxu0
        %549 = vdwg.mxu0
        %v550 = vrcp.pop %v529
        %v551 = vmul.f32 %v547, %v550
        %s552 = scalar_lea.vmem [#allocation10], 4
        %v553 = vld [vmem:[%s552] sm:$0xf]
        %v554 = vpack.c.bf16 %v551, %v551
        %v556 = vsel %vm441, %v554, 0
        %vm558 = vcmask 1043456
        %v560 = vsel %vm558, %v553, 0
        %562 = vmatpush.bf16.msra.mxu0 0
        %563 = vmatpush.bf16.msra.mxu0 0
        %564 = vmatpush.bf16.msra.mxu0 0
        %565 = vmatpush.bf16.msra.mxu0 0
        %566 = vmatpush.bf16.msra.mxu0 0
        %567 = vmatpush.bf16.msra.mxu0 0
        %568 = vmatpush.bf16.msra.mxu0 0
        %569 = vmatpush.bf16.msra.mxu0 %v560
        %570 = vmatmul.bf16.gmra.mxu0 %v556
        %v571 = vpop.f32.mrf.mxu0
        %v572 = vadd.f32 0.0, %v571
        %v573 = vpop.f32.mrf.mxu0
        %574 = vdwg.mxu0
        %v576 = vsel %vm441, %v494, 0
        %v579 = vsel %vm558, %v493, 0
        %581 = vmatpush.bf16.msra.mxu0 0
        %582 = vmatpush.bf16.msra.mxu0 0
        %583 = vmatpush.bf16.msra.mxu0 0
        %584 = vmatpush.bf16.msra.mxu0 0
        %585 = vmatpush.bf16.msra.mxu0 0
        %586 = vmatpush.bf16.msra.mxu0 0
        %587 = vmatpush.bf16.msra.mxu0 0
        %588 = vmatpush.bf16.msra.mxu0 %v579
        %589 = vmatmul.bf16.gmra.mxu0 %v576
        %v590 = vpop.f32.mrf.mxu0
        %v591 = vadd.f32 %v572, %v590
        %v592 = vpop.f32.mrf.mxu0
        %593 = vdwg.mxu0
        %594 = vrot.lane.b32.xlu0 %v497, 112
        %v595 = vpop.permute.xlu0 %594
        %596 = vrot.lane.b32.xlu0 %v440, 112
        %v597 = vpop.permute.xlu0 %596
        %v599 = vsel %vm441, %v595, 0
        %v602 = vsel %vm441, %v597, 0
        %604 = vmatpush.bf16.xpose.msra.mxu0 0
        %605 = vmatpush.bf16.xpose.msra.mxu0 0
        %606 = vmatpush.bf16.xpose.msra.mxu0 0
        %607 = vmatpush.bf16.xpose.msra.mxu0 0
        %608 = vmatpush.bf16.xpose.msra.mxu0 0
        %609 = vmatpush.bf16.xpose.msra.mxu0 0
        %610 = vmatpush.bf16.xpose.msra.mxu0 0
        %611 = vmatpush.bf16.xpose.msra.mxu0 %v602
        %612 = vmatmul.bf16.gmra.mxu0 %v599
        %v613 = vpop.f32.mrf.mxu0
        %v614 = vadd.f32 0.0, %v613
        %v615 = vpop.f32.mrf.mxu0
        %616 = vdwg.mxu0
        %v617 = vsel %vm461, %v614, -inf
        %618 = vmax.xlane.f32.xlu0 %v617
        %v619 = vpop.xlane.xlu0 %618
        %v620 = vsub.f32 %v614, %v619
        %v621 = vmul.f32 %v620, 1.442695
        %v622 = vpow.pop %v621
        %v623 = vsel %vm461, %v622, 0.0
        %624 = vadd.xlane.f32.xlu0 %v623
        %v625 = vpop.xlane.xlu0 %624
        %v626 = vpack.c.bf16 %v622, %v622
        %627 = vrot.lane.b32.xlu0 %v440, 80
        %v628 = vpop.permute.xlu0 %627
        %v631 = vsel %vm461, %v626, 0
        %633 = vmatpush.bf16.msra.mxu0 0
        %634 = vmatpush.bf16.msra.mxu0 0
        %635 = vmatpush.bf16.msra.mxu0 0
        %636 = vmatpush.bf16.msra.mxu0 0
        %637 = vmatpush.bf16.msra.mxu0 0
        %638 = vmatpush.bf16.msra.mxu0 0
        %639 = vmatpush.bf16.msra.mxu0 0
        %640 = vmatpush.bf16.msra.mxu0 %v628
        %641 = vmatmul.bf16.gmra.mxu0 %v631
        %v642 = vpop.f32.mrf.mxu0
        %v643 = vadd.f32 0.0, %v642
        %v644 = vpop.f32.mrf.mxu0
        %645 = vdwg.mxu0
        %v646 = vrcp.pop %v625
        %v647 = vmul.f32 %v643, %v646
        %s648 = scalar_lea.vmem [#allocation10], 8
        %v649 = vld [vmem:[%s648] sm:$0xf]
        %v650 = vpack.c.bf16 %v647, %v647
        %v652 = vsel %vm441, %v650, 0
        %v655 = vsel %vm558, %v649, 0
        %657 = vmatpush.bf16.msra.mxu0 0
        %658 = vmatpush.bf16.msra.mxu0 0
        %659 = vmatpush.bf16.msra.mxu0 0
        %660 = vmatpush.bf16.msra.mxu0 0
        %661 = vmatpush.bf16.msra.mxu0 0
        %662 = vmatpush.bf16.msra.mxu0 0
        %663 = vmatpush.bf16.msra.mxu0 0
        %664 = vmatpush.bf16.msra.mxu0 %v655
        %665 = vmatmul.bf16.gmra.mxu0 %v652
        %v666 = vpop.f32.mrf.mxu0
        %v667 = vadd.f32 0.0, %v666
        %v668 = vpop.f32.mrf.mxu0
        %669 = vdwg.mxu0
        %v670 = vadd.f32 %v591, %v667
        %671 = vrot.lane.b32.xlu0 %v497, 104
        %v672 = vpop.permute.xlu0 %671
        %673 = vrot.lane.b32.xlu0 %v440, 104
        %v674 = vpop.permute.xlu0 %673
        %v676 = vsel %vm441, %v672, 0
        %v679 = vsel %vm441, %v674, 0
        %681 = vmatpush.bf16.xpose.msra.mxu0 0
        %682 = vmatpush.bf16.xpose.msra.mxu0 0
        %683 = vmatpush.bf16.xpose.msra.mxu0 0
        %684 = vmatpush.bf16.xpose.msra.mxu0 0
        %685 = vmatpush.bf16.xpose.msra.mxu0 0
        %686 = vmatpush.bf16.xpose.msra.mxu0 0
        %687 = vmatpush.bf16.xpose.msra.mxu0 0
        %688 = vmatpush.bf16.xpose.msra.mxu0 %v679
        %689 = vmatmul.bf16.gmra.mxu0 %v676
        %v690 = vpop.f32.mrf.mxu0
        %v691 = vadd.f32 0.0, %v690
        %v692 = vpop.f32.mrf.mxu0
        %693 = vdwg.mxu0
        %v694 = vsel %vm461, %v691, -inf
        %695 = vmax.xlane.f32.xlu0 %v694
        %v696 = vpop.xlane.xlu0 %695
        %v697 = vsub.f32 %v691, %v696
        %v698 = vmul.f32 %v697, 1.442695
        %v699 = vpow.pop %v698
        %v700 = vsel %vm461, %v699, 0.0
        %701 = vadd.xlane.f32.xlu0 %v700
        %v702 = vpop.xlane.xlu0 %701
        %v703 = vpack.c.bf16 %v699, %v699
        %704 = vrot.lane.b32.xlu0 %v440, 72
        %v705 = vpop.permute.xlu0 %704
        %v708 = vsel %vm461, %v703, 0
        %710 = vmatpush.bf16.msra.mxu0 0
        %711 = vmatpush.bf16.msra.mxu0 0
        %712 = vmatpush.bf16.msra.mxu0 0
        %713 = vmatpush.bf16.msra.mxu0 0
        %714 = vmatpush.bf16.msra.mxu0 0
        %715 = vmatpush.bf16.msra.mxu0 0
        %716 = vmatpush.bf16.msra.mxu0 0
        %717 = vmatpush.bf16.msra.mxu0 %v705
        %718 = vmatmul.bf16.gmra.mxu0 %v708
        %v719 = vpop.f32.mrf.mxu0
        %v720 = vadd.f32 0.0, %v719
        %v721 = vpop.f32.mrf.mxu0
        %722 = vdwg.mxu0
        %v723 = vrcp.pop %v702
        %v724 = vmul.f32 %v720, %v723
        %s725 = scalar_lea.vmem [#allocation10], 12
        %v726 = vld [vmem:[%s725] sm:$0xf]
        %v727 = vpack.c.bf16 %v724, %v724
        %v729 = vsel %vm441, %v727, 0
        %v732 = vsel %vm558, %v726, 0
        %734 = vmatpush.bf16.msra.mxu0 0
        %735 = vmatpush.bf16.msra.mxu0 0
        %736 = vmatpush.bf16.msra.mxu0 0
        %737 = vmatpush.bf16.msra.mxu0 0
        %738 = vmatpush.bf16.msra.mxu0 0
        %739 = vmatpush.bf16.msra.mxu0 0
        %740 = vmatpush.bf16.msra.mxu0 0
        %741 = vmatpush.bf16.msra.mxu0 %v732
        %742 = vmatmul.bf16.gmra.mxu0 %v729
        %v743 = vpop.f32.mrf.mxu0
        %v744 = vadd.f32 0.0, %v743
        %v745 = vpop.f32.mrf.mxu0
        %746 = vdwg.mxu0
        %v747 = vadd.f32 %v670, %v744
        %v748 = vld [vmem:[%s5] sm:$0x1]
        %v750 = vperm.slane %v748, 0
        %v752 = vadd.f32 %v747, %v750
        %753 = vst.msk [vmem:[%s359] sm:$0xff] %vm380, %v752
        %s754 = sand.u32 %s171, 1
        %s755 = scalar_lea.sflag [#allocation4], %s754
        %s756 = sand.u32 %s171, 1
        %s757 = smul.addr %s756, 8
        %s758 = scalar_lea.vmem [#allocation11], %s757
        // Predicated region
        $region65: #{tpu_custom_call.1} parent=43 // pred_check
          %p759 = pneg %p181
        $region66: #{tpu_custom_call.1} parent=43 // pred_check_branch
          %761 = sbr.rel (%p759) target = $region68
        $region67: #{tpu_custom_call.1} parent=43 // pred_region
          %763 = vsyncadd %s755, 0
          %s764 = smul.addr %s27, 8
          %s765 = scalar_lea.hbm %s6, %s764
          %s767 = sshll.u32 %s758, 4
          %s768 = int_to_ptr.vmem [resolvable:$true] %s767
          %s769 = sshll.u32 %s765, 4
          %s770 = int_to_ptr.hbm [resolvable:$true] %s769
          %772 = dma.vmem_to_hbm [thread:$0]  %s768, 128, %s770, %s755
        $region68: #{tpu_custom_call.1} parent=43 // pred_fallthru
          _
      $region44: #{tpu_custom_call.1} parent=5 // pred_fallthru
        _
      %p773 = scmp.le.s32.totalorder 2, %s22
      // Predicated region
      $region69: #{tpu_custom_call.1} parent=5 // pred_check
        %p774 = pneg %p773
      $region70: #{tpu_custom_call.1} parent=5 // pred_check_branch
        %776 = sbr.rel (%p774) target = $region72
      $region71: #{tpu_custom_call.1} parent=5 // pred_region
        %s777 = ssub.s32 %s22, 2
        // Predicated region
        $region73: #{tpu_custom_call.1} parent=71 // pred_check
          %p778 = pneg %p187
        $region74: #{tpu_custom_call.1} parent=71 // pred_check_branch
          %780 = sbr.rel (%p778) target = $region76
        $region75: #{tpu_custom_call.1} parent=71 // pred_region
          %s781 = sand.u32 %s172, 1
          %s782 = scalar_lea.sflag [#allocation4], %s781
          %s783 = sand.u32 %s172, 1
          %s784 = smul.addr %s783, 8
          %s785 = scalar_lea.vmem [#allocation11], %s784
          %787 = dma.done %s782, 128
        $region76: #{tpu_custom_call.1} parent=71 // pred_fallthru
          _
      $region72: #{tpu_custom_call.1} parent=5 // pred_fallthru
        _
    $region6: #{tpu_custom_call.1} parent=1 // loop_footer
      %s26 = sadd.s32 1, %s22
    $region7: #{tpu_custom_call.1} parent=1 // loop_footer_branch
      %21 = sbr.rel target = $region3
    $region8: #{tpu_custom_call.1} parent=1 // loop_exit
      _
    %788 = vsyncpa [#allocation3], 1
    %s789 = scalar_lea.sflag [#allocation3], 1
    %790 = vsyncpa %s789, 1
    %791 = vsyncpa [#allocation6], 1
    %s792 = scalar_lea.sflag [#allocation6], 1
    %793 = vsyncpa %s792, 1
    %794 = vsyncpa [#allocation9], 1
    %795 = vsyncpa [#allocation4], 1
    %s796 = scalar_lea.sflag [#allocation4], 1
    %797 = vsyncpa %s796, 1

</llo_original>
